<compile_context>
chip_gen: v6e
topology: v6e:2x2x1
jax: 0.10.0
libtpu: 0.0.40
codegen_flags: <defaults>
</compile_context>

<pallas_src>
import jax
import jax.numpy as jnp
from jax import lax
from jax.experimental import pallas as pl
from jax.experimental.pallas import tpu as pltpu


def _round_up(a, b):
    return ((a + b - 1) // b) * b


# ---------------------------------------------------------------------------
# Prologue (1-D row grid, runs over all nodes once):
#   xp = x @ W_gat (stored as bf16 for the MXU aggregation)
#   a_src[j] = <att_src, xp[j]>  -> [1, N] row (broadcast over destinations)
#   a_dst[i] = <att_dst, xp[i]>  -> [N, 1] column (streamed per row tile)
# ---------------------------------------------------------------------------
def gat_proj_kernel(x_ref, wg_ref, asrc_ref, adst_ref,
                    xpb_ref, asr_ref, adst_o_ref):
    xp = jnp.dot(x_ref[...], wg_ref[...], preferred_element_type=jnp.float32)  # [TR, H]
    xpb_ref[...] = xp.astype(jnp.bfloat16)
    # a_src row: contract over H without materialising a transpose -> [1, TR]
    asr_ref[...] = lax.dot_general(
        asrc_ref[...], xp,
        dimension_numbers=(((1,), (1,)), ((), ())),
        preferred_element_type=jnp.float32)
    # a_dst column -> [TR, 1]
    adst_o_ref[...] = jnp.sum(xp * adst_ref[...], axis=-1, keepdims=True)


# ---------------------------------------------------------------------------
# Main tiled kernel: one grid step = TQ destination nodes.
#   streamed : adj row tile [TQ, Nc] (bf16) + a_dst [TQ, 1]  (double-buffered)
#   resident : xp_bf16 [Nc, H], a_src_row [1, Nc], biases, MLP weights
# ---------------------------------------------------------------------------
def gcn_tile_kernel(xpb_ref, asr_ref, adst_ref, bg_ref, adj_ref,
                    w1_ref, b1_ref, w2_ref, b2_ref, o_ref):
    # e[i, j] = leaky_relu(a_dst[i] + a_src[j], 0.2)
    e = adst_ref[...] + asr_ref[...]                                      # [TQ, Nc]
    e = jnp.where(e >= 0.0, e, 0.2 * e)

    # masked softmax over source nodes j (per destination row i), f32
    mask = adj_ref[...] > 0.0                                             # adj is bf16 0/1
    m = jnp.max(jnp.where(mask, e, -1e30), axis=-1, keepdims=True)        # [TQ, 1]
    # keep the select (NOT multiplicative masking: inf * 0 -> NaN for edgeless rows)
    p = jnp.where(mask, jnp.exp(e - m), 0.0)
    s = jnp.sum(p, axis=-1, keepdims=True)
    inv = pl.reciprocal(jnp.where(s > 0.0, s, 1.0), approx=False)         # [TQ,1]: exact is free
    attn = p * inv                                                        # rows w/o edges -> 0

    # aggregation on the MXU: bf16 inputs, f32 accumulation
    h = jnp.dot(attn.astype(jnp.bfloat16), xpb_ref[...],
                preferred_element_type=jnp.float32) + bg_ref[...]         # [TQ, H]

    # tanh -> Linear -> relu -> Linear (small matmuls, f32); lane-dense output
    h = jnp.tanh(h)
    h = jnp.dot(h, w1_ref[...], preferred_element_type=jnp.float32) + b1_ref[...]
    h = jnp.maximum(h, 0.0)
    out = jnp.dot(h, w2_ref[...], preferred_element_type=jnp.float32) + b2_ref[...]
    o_ref[...] = out.astype(o_ref.dtype)                                  # unmasked vst


def _plan_tiles(N, Nc, H, OD, budget_bytes):
    """Pick the destination-row tile TQ against a VMEM budget (v7x-safe)."""
    # resident bytes (x2 as conservative double-buffer accounting)
    resident = 2 * (Nc * H * 2 + Nc * 4 + (H * H + H * OD + 4 * H + OD) * 4)
    # per destination row: streamed adj (bf16) + a_dst + out (double-buffered),
    # plus ~3 live [TQ, Nc] f32 temporaries inside the kernel (e / p / attn).
    per_row = 2 * (Nc * 2 + 4 + OD * 4) + 3 * Nc * 4
    n_rows = _round_up(max(N, 8), 8)
    if resident + n_rows * per_row <= budget_bytes:
        tq, nr = n_rows, n_rows                      # whole problem in one grid step
    else:
        tq = (budget_bytes - resident) // per_row
        tq = max(16, min(1024, tq))
        tq = (tq // 128) * 128 if tq >= 128 else (tq // 16) * 16
        n_tiles = -(-N // tq)
        if n_tiles > 1 and n_tiles % 2 == 1:         # prefer even tile count (v7x megacore)
            alt = _round_up(-(-N // (n_tiles + 1)), 128)
            if 128 <= alt <= tq:
                tq = alt
        nr = _round_up(N, tq)
    vmem_limit = int(min(max(resident + tq * per_row + (8 << 20), 16 << 20), 64 << 20))
    return tq, nr, vmem_limit


def gcn_forward(x, adj, params, *, vmem_budget_bytes=48 << 20):
    """x: [N, Din] f32, adj: [N, N] f32 {0,1} with adj[dst, src] = 1."""
    N, Din = x.shape
    H = params["w_gat"].shape[1]
    out_dim = params["w2"].shape[1]
    OD = _round_up(max(out_dim, 128), 128)          # lane-dense output width

    Nc = _round_up(N, 128)                          # source / lane (column) padding
    TQ, Nr, vmem_limit = _plan_tiles(N, Nc, H, OD, vmem_budget_bytes)
    Npad = max(Nr, Nc)                              # row extent for the prologue

    # prologue row tile (full-extent when small; 128-multiple divisor when large)
    TR = Npad
    if Npad > 2048:
        for cand in (2048, 1024, 512, 256, 128):
            if Npad % cand == 0:
                TR = cand
                break

    # glue: pad inputs (padded rows/cols are zero so they never contribute;
    # padded output rows/cols are sliced off below).
    # TODO(synk): on v5e, stream adj as int8 / packed bitmask to halve the O(N^2)
    # HBM stream (mind the (32,128) int8 min tile).
    x_p = jnp.zeros((Npad, Din), jnp.float32).at[:N].set(x)
    adj_p = jnp.zeros((Nr, Nc), jnp.bfloat16).at[:N, :N].set(adj.astype(jnp.bfloat16))
    w2_p = jnp.zeros((H, OD), jnp.float32).at[:, :out_dim].set(params["w2"])
    b2_p = jnp.zeros((1, OD), jnp.float32).at[:, :out_dim].set(params["b2"])

    # ---- prologue: projection + attention logits (row-tiled, 1-D grid) ----
    xp_bf16, a_src_row, a_dst = pl.pallas_call(
        gat_proj_kernel,
        out_shape=(jax.ShapeDtypeStruct((Npad, H), jnp.bfloat16),
                   jax.ShapeDtypeStruct((1, Npad), jnp.float32),
                   jax.ShapeDtypeStruct((Npad, 1), jnp.float32)),
        grid_spec=pltpu.PrefetchScalarGridSpec(
            num_scalar_prefetch=0,
            grid=(Npad // TR,),
            in_specs=[
                pl.BlockSpec((TR, Din), lambda i: (i, 0)),
                pl.BlockSpec((Din, H), lambda i: (0, 0)),
                pl.BlockSpec((1, H), lambda i: (0, 0)),
                pl.BlockSpec((1, H), lambda i: (0, 0)),
            ],
            out_specs=(
                pl.BlockSpec((TR, H), lambda i: (i, 0)),
                pl.BlockSpec((1, TR), lambda i: (0, i)),
                pl.BlockSpec((TR, 1), lambda i: (i, 0)),
            ),
        ),
        compiler_params=pltpu.CompilerParams(dimension_semantics=("parallel",)),
    )(x_p, params["w_gat"], params["att_src"], params["att_dst"])

    # ---- main: masked softmax attention + aggregation + MLP head ----
    # TODO(synk): for very large graphs add an "arbitrary" source-chunk grid axis
    # with flash-style online-softmax accumulation (bounds VMEM to O(TQ*TK));
    # needed on v7x once a [TQ, Nc] slab no longer fits 64 MiB.
    out = pl.pallas_call(
        gcn_tile_kernel,
        out_shape=jax.ShapeDtypeStruct((Nr, OD), jnp.float32),
        grid_spec=pltpu.PrefetchScalarGridSpec(
            num_scalar_prefetch=0,
            grid=(Nr // TQ,),
            in_specs=[
                pl.BlockSpec((Nc, H), lambda i: (0, 0)),    # xp bf16 (resident, source rows)
                pl.BlockSpec((1, Nc), lambda i: (0, 0)),    # a_src row (resident)
                pl.BlockSpec((TQ, 1), lambda i: (i, 0)),    # a_dst (streamed per tile)
                pl.BlockSpec((1, H), lambda i: (0, 0)),     # b_gat
                pl.BlockSpec((TQ, Nc), lambda i: (i, 0)),   # adj row tile (streamed)
                pl.BlockSpec((H, H), lambda i: (0, 0)),     # w1
                pl.BlockSpec((1, H), lambda i: (0, 0)),     # b1
                pl.BlockSpec((H, OD), lambda i: (0, 0)),    # w2 (lane-padded)
                pl.BlockSpec((1, OD), lambda i: (0, 0)),    # b2 (lane-padded)
            ],
            out_specs=pl.BlockSpec((TQ, OD), lambda i: (i, 0)),
        ),
        compiler_params=pltpu.CompilerParams(
            dimension_semantics=("parallel",),              # v7x: shard row tiles over 2 TCs
            vmem_limit_bytes=vmem_limit),
    )(xp_bf16, a_src_row, a_dst, params["b_gat"], adj_p,
      params["w1"], params["b1"], w2_p, b2_p)
    return out[:N, :out_dim]


def gcn_reference(x, adj, p):
    # pure-JAX f32 reference for correctness checking
    xp = x @ p["w_gat"]
    a_dst = jnp.sum(xp * p["att_dst"], axis=-1, keepdims=True)
    a_src = jnp.sum(xp * p["att_src"], axis=-1, keepdims=True)
    e = a_dst + a_src.T
    e = jnp.where(e >= 0.0, e, 0.2 * e)
    e = jnp.where(adj > 0.0, e, -1e30)
    m = jnp.max(e, axis=-1, keepdims=True)
    pr = jnp.exp(e - m) * adj
    s = jnp.sum(pr, axis=-1, keepdims=True)
    attn = pr / jnp.where(s > 0.0, s, 1.0)
    h = attn @ xp + p["b_gat"]
    h = jnp.tanh(h)
    h = jnp.maximum(h @ p["w1"] + p["b1"], 0.0)
    return h @ p["w2"] + p["b2"]


def init_params(key, input_dim, hidden_dim, output_dim):
    ks = jax.random.split(key, 7)

    def glorot(k, shape):
        lim = (6.0 / (shape[0] + shape[-1])) ** 0.5
        return jax.random.uniform(k, shape, jnp.float32, -lim, lim)

    return {
        "w_gat":   glorot(ks[0], (input_dim, hidden_dim)),
        "att_src": glorot(ks[1], (1, hidden_dim)),
        "att_dst": glorot(ks[2], (1, hidden_dim)),
        "b_gat":   jnp.zeros((1, hidden_dim), jnp.float32),
        "w1":      glorot(ks[3], (hidden_dim, hidden_dim)),
        "b1":      0.01 * jax.random.normal(ks[4], (1, hidden_dim), jnp.float32),
        "w2":      glorot(ks[5], (hidden_dim, output_dim)),
        "b2":      0.01 * jax.random.normal(ks[6], (1, output_dim), jnp.float32),
    }


if __name__ == "__main__":
    N, input_dim, hidden_dim, output_dim = 300, 8, 32, 4

    key = jax.random.PRNGKey(0)
    kx, kp = jax.random.split(key)

    # node features
    x = jax.random.normal(kx, (N, input_dim), jnp.float32)

    # edge_index for a bidirectional ring graph: [2, E], row 0 = src, row 1 = dst
    idx = jnp.arange(N)
    src = jnp.concatenate([idx, idx])
    dst = jnp.concatenate([(idx + 1) % N, (idx - 1) % N])
    edge_index = jnp.stack([src, dst])                     # [2, 2N]

    # dense adjacency mask adj[dst, src] (glue; the hot path stays in-kernel)
    adj = jnp.zeros((N, N), jnp.float32).at[edge_index[1], edge_index[0]].set(1.0)

    params = init_params(kp, input_dim, hidden_dim, output_dim)

    out = jax.block_until_ready(gcn_forward(x, adj, params))   # N=300 -> single grid step
    ref = gcn_reference(x, adj, params)

    assert out.shape == (N, output_dim)
    max_err = float(jnp.max(jnp.abs(out - ref)))
    # tolerance accounts for bf16 MXU aggregation
    assert jnp.allclose(out, ref, atol=2e-2, rtol=2e-2), f"mismatch vs reference (max abs err={max_err})"

    print("KERNEL_OK")
</pallas_src>

<mosaic_0001>
module attributes {stable_mosaic.version = 11 : i64} {
  func.func @gat_proj_kernel(%arg0: i32, %arg1: memref<384x8xf32, #tpu.memory_space<vmem>>, %arg2: memref<8x32xf32, #tpu.memory_space<vmem>>, %arg3: memref<1x32xf32, #tpu.memory_space<vmem>>, %arg4: memref<1x32xf32, #tpu.memory_space<vmem>>, %arg5: memref<384x32xbf16, #tpu.memory_space<vmem>>, %arg6: memref<1x384xf32, #tpu.memory_space<vmem>>, %arg7: memref<384x1xf32, #tpu.memory_space<vmem>>) attributes {dimension_semantics = [#tpu.dimension_semantics<parallel>], iteration_bounds = array<i64: 1>, scalar_prefetch = 0 : i64, scratch_operands = 0 : i64, tpu.core_type = #tpu.core_type<tc>, window_params = [{transform_indices = @transform_0, window_bounds = array<i64: 384, 8>}, {pipeline_mode = #tpu.pipeline_mode<synchronous>, transform_indices = @transform_1, window_bounds = array<i64: 8, 32>}, {pipeline_mode = #tpu.pipeline_mode<synchronous>, transform_indices = @transform_2, window_bounds = array<i64: 1, 32>}, {pipeline_mode = #tpu.pipeline_mode<synchronous>, transform_indices = @transform_3, window_bounds = array<i64: 1, 32>}, {transform_indices = @transform_4, window_bounds = array<i64: 384, 32>}, {transform_indices = @transform_5, window_bounds = array<i64: 1, 384>}, {transform_indices = @transform_6, window_bounds = array<i64: 384, 1>}]} {
    %c0 = arith.constant 0 : index
    %c0_0 = arith.constant 0 : index
    %0 = vector.load %arg1[%c0, %c0_0] : memref<384x8xf32, #tpu.memory_space<vmem>>, vector<384x8xf32>
    %c0_1 = arith.constant 0 : index
    %c0_2 = arith.constant 0 : index
    %1 = vector.load %arg2[%c0_1, %c0_2] : memref<8x32xf32, #tpu.memory_space<vmem>>, vector<8x32xf32>
    %cst = arith.constant dense<0.000000e+00> : vector<384x32xf32>
    %2 = tpu.matmul %0, %1, %cst {dimension_numbers = #tpu.dot_dimension_numbers<[1], [0], [0], [1], [0, 0, 1, 1], [], []>} : vector<384x8xf32>, vector<8x32xf32>, vector<384x32xf32> -> vector<384x32xf32>
    %3 = arith.truncf %2 : vector<384x32xf32> to vector<384x32xbf16>
    %c0_3 = arith.constant 0 : index
    %c0_4 = arith.constant 0 : index
    %4 = vector.load %arg5[%c0_3, %c0_4] : memref<384x32xbf16, #tpu.memory_space<vmem>>, vector<384x32xbf16>
    tpu.vector_store %arg5[%c0_3, %c0_4], %3 {strides = array<i32>} : memref<384x32xbf16, #tpu.memory_space<vmem>>, vector<384x32xbf16>,
    %c0_5 = arith.constant 0 : index
    %c0_6 = arith.constant 0 : index
    %5 = vector.load %arg3[%c0_5, %c0_6] : memref<1x32xf32, #tpu.memory_space<vmem>>, vector<1x32xf32>
    %cst_7 = arith.constant dense<0.000000e+00> : vector<1x384xf32>
    %6 = tpu.matmul %5, %2, %cst_7 {dimension_numbers = #tpu.dot_dimension_numbers<[1], [1], [0], [0], [0, 0, 1, 0], [], []>} : vector<1x32xf32>, vector<384x32xf32>, vector<1x384xf32> -> vector<1x384xf32>
    %c0_8 = arith.constant 0 : index
    %c0_9 = arith.constant 0 : index
    %7 = vector.load %arg6[%c0_8, %c0_9] : memref<1x384xf32, #tpu.memory_space<vmem>>, vector<1x384xf32>
    tpu.vector_store %arg6[%c0_8, %c0_9], %6 {strides = array<i32>} : memref<1x384xf32, #tpu.memory_space<vmem>>, vector<1x384xf32>,
    %c0_10 = arith.constant 0 : index
    %c0_11 = arith.constant 0 : index
    %8 = vector.load %arg4[%c0_10, %c0_11] : memref<1x32xf32, #tpu.memory_space<vmem>>, vector<1x32xf32>
    %9 = vector.broadcast %8 : vector<1x32xf32> to vector<384x32xf32>
    %10 = arith.mulf %2, %9 : vector<384x32xf32>
    %cst_12 = arith.constant dense<0.000000e+00> : vector<384xf32>
    %11 = vector.multi_reduction <add>, %10, %cst_12 [1] : vector<384x32xf32> to vector<384xf32>
    %12 = vector.shape_cast %11 : vector<384xf32> to vector<384x1xf32>
    %c0_13 = arith.constant 0 : index
    %c0_14 = arith.constant 0 : index
    %13 = vector.load %arg7[%c0_13, %c0_14] : memref<384x1xf32, #tpu.memory_space<vmem>>, vector<384x1xf32>
    tpu.vector_store %arg7[%c0_13, %c0_14], %12 {strides = array<i32>} : memref<384x1xf32, #tpu.memory_space<vmem>>, vector<384x1xf32>,
    return
  }
  func.func @transform_0(%arg0: i32) -> (i32, i32) {
    %c0_i32 = arith.constant 0 : i32
    %c0_i32_0 = arith.constant 0 : i32
    return %arg0, %c0_i32 : i32, i32
  }
  func.func @transform_1(%arg0: i32) -> (i32, i32) {
    %c0_i32 = arith.constant 0 : i32
    %c0_i32_0 = arith.constant 0 : i32
    %c0_i32_1 = arith.constant 0 : i32
    return %c0_i32, %c0_i32_0 : i32, i32
  }
  func.func @transform_2(%arg0: i32) -> (i32, i32) {
    %c0_i32 = arith.constant 0 : i32
    %c0_i32_0 = arith.constant 0 : i32
    %c0_i32_1 = arith.constant 0 : i32
    return %c0_i32, %c0_i32_0 : i32, i32
  }
  func.func @transform_3(%arg0: i32) -> (i32, i32) {
    %c0_i32 = arith.constant 0 : i32
    %c0_i32_0 = arith.constant 0 : i32
    %c0_i32_1 = arith.constant 0 : i32
    return %c0_i32, %c0_i32_0 : i32, i32
  }
  func.func @transform_4(%arg0: i32) -> (i32, i32) {
    %c0_i32 = arith.constant 0 : i32
    %c0_i32_0 = arith.constant 0 : i32
    return %arg0, %c0_i32 : i32, i32
  }
  func.func @transform_5(%arg0: i32) -> (i32, i32) {
    %c0_i32 = arith.constant 0 : i32
    %c0_i32_0 = arith.constant 0 : i32
    return %c0_i32, %arg0 : i32, i32
  }
  func.func @transform_6(%arg0: i32) -> (i32, i32) {
    %c0_i32 = arith.constant 0 : i32
    %c0_i32_0 = arith.constant 0 : i32
    return %arg0, %c0_i32 : i32, i32
  }
}

</mosaic_0001>

<llo_original>
// kernel: tpu_custom_call.1
$region0: #{tpu_custom_call.1}
  #allocation0 [shape = 'u32[]', space=smem, size = 0x4, offset = 0x4, fixed_abs, tag = 'smem constant byte address 0x4 - core index']
  #allocation1 [shape = 'u32[144,128]{1,0:T(1,128)}', space=vmem, size = 0x12000, scoped, tag = 'internal scratch']
  %s0 = inlined_call_operand.vmem [shape: f32[384,8], index: 0, kind: input, shape index: {}]
  %s1 = inlined_call_operand.vmem [shape: f32[8,32], index: 1, kind: input, shape index: {}]
  %s2 = inlined_call_operand.vmem [shape: f32[1,32], index: 2, kind: input, shape index: {}]
  %s3 = inlined_call_operand.vmem [shape: f32[1,32], index: 3, kind: input, shape index: {}]
  %s4 = inlined_call_operand.vmem [shape: bf16[384,32], index: 4, kind: output, shape index: {0}]
  %s5 = inlined_call_operand.hbm [shape: f32[1,384], index: 5, kind: output, shape index: {1}]
  %s6 = inlined_call_operand.vmem [shape: f32[384,1], index: 6, kind: output, shape index: {2}]
  %7 = xla_tuple %s4, %s5, %s6
  %s8 = sld [smem:[#allocation0]]
  $region42: #{tpu_custom_call.1} parent=0
    _
  %s10 = ssub.s32 1, %s8
  %s11 = scalar_select 0, %s10, %s8
  $region1: #{tpu_custom_call.1} parent=0
    #allocation2 [shape = 'u8[1536]{0}', space=vmem, size = 0x800, scoped, tag = 'output window, operand 1, single buffered']
    #allocation3 [shape = 's32[1]{0}', space=sflag, size = 0x4, scoped, tag = 'scoped memory for tpu_custom_call.1']
    %12 = vsyncpa [#allocation3], 0
    // Predicated region
    $region2: #{tpu_custom_call.1} parent=1 // pred_check
      _
    $region3: #{tpu_custom_call.1} parent=1 // pred_check_branch
      %14 = sbr.rel (0) target = $region5
    $region4: #{tpu_custom_call.1} parent=1 // pred_region
      _
    $region5: #{tpu_custom_call.1} parent=1 // pred_fallthru
      _
    // Predicated region
    $region6: #{tpu_custom_call.1} parent=1 // pred_check
      _
    $region7: #{tpu_custom_call.1} parent=1 // pred_check_branch
      %16 = sbr.rel (0) target = $region9
    $region8: #{tpu_custom_call.1} parent=1 // pred_region
      _
    $region9: #{tpu_custom_call.1} parent=1 // pred_fallthru
      _
    // Predicated region
    $region10: #{tpu_custom_call.1} parent=1 // pred_check
      _
    $region11: #{tpu_custom_call.1} parent=1 // pred_check_branch
      %18 = sbr.rel (0) target = $region13
    $region12: #{tpu_custom_call.1} parent=1 // pred_region
      _
    $region13: #{tpu_custom_call.1} parent=1 // pred_fallthru
      _
    // Predicated region
    $region14: #{tpu_custom_call.1} parent=1 // pred_check
      _
    $region15: #{tpu_custom_call.1} parent=1 // pred_check_branch
      %20 = sbr.rel (0) target = $region17
    $region16: #{tpu_custom_call.1} parent=1 // pred_region
      _
    $region17: #{tpu_custom_call.1} parent=1 // pred_fallthru
      _
    %v21 = vld [vmem:[%s0] sm:$0xff]
    %v22 = vld [vmem:[%s0 + $0x8] sm:$0xff]
    %v23 = vld [vmem:[%s0 + $0x10] sm:$0xff]
    %v24 = vld [vmem:[%s0 + $0x18] sm:$0xff]
    %v25 = vld [vmem:[%s0 + $0x20] sm:$0xff]
    %v26 = vld [vmem:[%s0 + $0x28] sm:$0xff]
    %v27 = vld [vmem:[%s0 + $0x30] sm:$0xff]
    %v28 = vld [vmem:[%s0 + $0x38] sm:$0xff]
    %v29 = vld [vmem:[%s0 + $0x40] sm:$0xff]
    %v30 = vld [vmem:[%s0 + $0x48] sm:$0xff]
    %v31 = vld [vmem:[%s0 + $0x50] sm:$0xff]
    %v32 = vld [vmem:[%s0 + $0x58] sm:$0xff]
    %v33 = vld [vmem:[%s0 + $0x60] sm:$0xff]
    %v34 = vld [vmem:[%s0 + $0x68] sm:$0xff]
    %v35 = vld [vmem:[%s0 + $0x70] sm:$0xff]
    %v36 = vld [vmem:[%s0 + $0x78] sm:$0xff]
    %v37 = vld [vmem:[%s0 + $0x80] sm:$0xff]
    %v38 = vld [vmem:[%s0 + $0x88] sm:$0xff]
    %v39 = vld [vmem:[%s0 + $0x90] sm:$0xff]
    %v40 = vld [vmem:[%s0 + $0x98] sm:$0xff]
    %v41 = vld [vmem:[%s0 + $0xa0] sm:$0xff]
    %v42 = vld [vmem:[%s0 + $0xa8] sm:$0xff]
    %v43 = vld [vmem:[%s0 + $0xb0] sm:$0xff]
    %v44 = vld [vmem:[%s0 + $0xb8] sm:$0xff]
    %v45 = vld [vmem:[%s0 + $0xc0] sm:$0xff]
    %v46 = vld [vmem:[%s0 + $0xc8] sm:$0xff]
    %v47 = vld [vmem:[%s0 + $0xd0] sm:$0xff]
    %v48 = vld [vmem:[%s0 + $0xd8] sm:$0xff]
    %v49 = vld [vmem:[%s0 + $0xe0] sm:$0xff]
    %v50 = vld [vmem:[%s0 + $0xe8] sm:$0xff]
    %v51 = vld [vmem:[%s0 + $0xf0] sm:$0xff]
    %v52 = vld [vmem:[%s0 + $0xf8] sm:$0xff]
    %v53 = vld [vmem:[%s0 + $0x100] sm:$0xff]
    %v54 = vld [vmem:[%s0 + $0x108] sm:$0xff]
    %v55 = vld [vmem:[%s0 + $0x110] sm:$0xff]
    %v56 = vld [vmem:[%s0 + $0x118] sm:$0xff]
    %v57 = vld [vmem:[%s0 + $0x120] sm:$0xff]
    %v58 = vld [vmem:[%s0 + $0x128] sm:$0xff]
    %v59 = vld [vmem:[%s0 + $0x130] sm:$0xff]
    %v60 = vld [vmem:[%s0 + $0x138] sm:$0xff]
    %v61 = vld [vmem:[%s0 + $0x140] sm:$0xff]
    %v62 = vld [vmem:[%s0 + $0x148] sm:$0xff]
    %v63 = vld [vmem:[%s0 + $0x150] sm:$0xff]
    %v64 = vld [vmem:[%s0 + $0x158] sm:$0xff]
    %v65 = vld [vmem:[%s0 + $0x160] sm:$0xff]
    %v66 = vld [vmem:[%s0 + $0x168] sm:$0xff]
    %v67 = vld [vmem:[%s0 + $0x170] sm:$0xff]
    %v68 = vld [vmem:[%s0 + $0x178] sm:$0xff]
    %v69 = vld [vmem:[%s1] sm:$0xff]
    %vm70 = vcmask 64512
    %v72 = vsel %vm70, %v21, 0
    %v75 = vsel %vm70, %v22, 0
    %v78 = vsel %vm70, %v23, 0
    %v81 = vsel %vm70, %v24, 0
    %v84 = vsel %vm70, %v25, 0
    %v87 = vsel %vm70, %v26, 0
    %v90 = vsel %vm70, %v27, 0
    %v93 = vsel %vm70, %v28, 0
    %v96 = vsel %vm70, %v29, 0
    %v99 = vsel %vm70, %v30, 0
    %v102 = vsel %vm70, %v31, 0
    %v105 = vsel %vm70, %v32, 0
    %v108 = vsel %vm70, %v33, 0
    %v111 = vsel %vm70, %v34, 0
    %v114 = vsel %vm70, %v35, 0
    %v117 = vsel %vm70, %v36, 0
    %v120 = vsel %vm70, %v37, 0
    %v123 = vsel %vm70, %v38, 0
    %v126 = vsel %vm70, %v39, 0
    %v129 = vsel %vm70, %v40, 0
    %v132 = vsel %vm70, %v41, 0
    %v135 = vsel %vm70, %v42, 0
    %v138 = vsel %vm70, %v43, 0
    %v141 = vsel %vm70, %v44, 0
    %v144 = vsel %vm70, %v45, 0
    %v147 = vsel %vm70, %v46, 0
    %v150 = vsel %vm70, %v47, 0
    %v153 = vsel %vm70, %v48, 0
    %v156 = vsel %vm70, %v49, 0
    %v159 = vsel %vm70, %v50, 0
    %v162 = vsel %vm70, %v51, 0
    %v165 = vsel %vm70, %v52, 0
    %v168 = vsel %vm70, %v53, 0
    %v171 = vsel %vm70, %v54, 0
    %v174 = vsel %vm70, %v55, 0
    %v177 = vsel %vm70, %v56, 0
    %v180 = vsel %vm70, %v57, 0
    %v183 = vsel %vm70, %v58, 0
    %v186 = vsel %vm70, %v59, 0
    %v189 = vsel %vm70, %v60, 0
    %v192 = vsel %vm70, %v61, 0
    %v195 = vsel %vm70, %v62, 0
    %v198 = vsel %vm70, %v63, 0
    %v201 = vsel %vm70, %v64, 0
    %v204 = vsel %vm70, %v65, 0
    %v207 = vsel %vm70, %v66, 0
    %v210 = vsel %vm70, %v67, 0
    %v213 = vsel %vm70, %v68, 0
    %215 = vmatprep.subr.mxu0 0.0
    %216 = vmatpush1.msra.mxu0 0.0
    %217 = vmatprep.subr.mxu0 0.0
    %218 = vmatpush1.msra.mxu0 0.0
    %219 = vmatprep.subr.mxu0 0.0
    %220 = vmatpush1.msra.mxu0 0.0
    %221 = vmatprep.subr.mxu0 0.0
    %222 = vmatpush1.msra.mxu0 0.0
    %223 = vmatprep.subr.mxu0 0.0
    %224 = vmatpush1.msra.mxu0 0.0
    %225 = vmatprep.subr.mxu0 0.0
    %226 = vmatpush1.msra.mxu0 0.0
    %227 = vmatprep.subr.mxu0 0.0
    %228 = vmatpush1.msra.mxu0 0.0
    %229 = vmatprep.subr.mxu0 0.0
    %230 = vmatpush1.msra.mxu0 0.0
    %231 = vmatprep.subr.mxu0 0.0
    %232 = vmatpush1.msra.mxu0 0.0
    %233 = vmatprep.subr.mxu0 0.0
    %234 = vmatpush1.msra.mxu0 0.0
    %235 = vmatprep.subr.mxu0 0.0
    %236 = vmatpush1.msra.mxu0 0.0
    %237 = vmatprep.subr.mxu0 0.0
    %238 = vmatpush1.msra.mxu0 0.0
    %239 = vmatprep.subr.mxu0 0.0
    %240 = vmatpush1.msra.mxu0 0.0
    %241 = vmatprep.subr.mxu0 0.0
    %242 = vmatpush1.msra.mxu0 0.0
    %243 = vmatprep.subr.mxu0 0.0
    %244 = vmatpush1.msra.mxu0 0.0
    %245 = vmatprep.subr.mxu0 0.0
    %246 = vmatpush1.msra.mxu0 %v69
    %247 = vmatprep.subr.mxu0 0.0
    %248 = vmatpush2.msra.mxu0 0.0
    %249 = vmatprep.subr.mxu0 0.0
    %250 = vmatpush2.msra.mxu0 0.0
    %251 = vmatprep.subr.mxu0 0.0
    %252 = vmatpush2.msra.mxu0 0.0
    %253 = vmatprep.subr.mxu0 0.0
    %254 = vmatpush2.msra.mxu0 0.0
    %255 = vmatprep.subr.mxu0 0.0
    %256 = vmatpush2.msra.mxu0 0.0
    %257 = vmatprep.subr.mxu0 0.0
    %258 = vmatpush2.msra.mxu0 0.0
    %259 = vmatprep.subr.mxu0 0.0
    %260 = vmatpush2.msra.mxu0 0.0
    %261 = vmatprep.subr.mxu0 0.0
    %262 = vmatpush2.msra.mxu0 0.0
    %263 = vmatprep.subr.mxu0 0.0
    %264 = vmatpush2.msra.mxu0 0.0
    %265 = vmatprep.subr.mxu0 0.0
    %266 = vmatpush2.msra.mxu0 0.0
    %267 = vmatprep.subr.mxu0 0.0
    %268 = vmatpush2.msra.mxu0 0.0
    %269 = vmatprep.subr.mxu0 0.0
    %270 = vmatpush2.msra.mxu0 0.0
    %271 = vmatprep.subr.mxu0 0.0
    %272 = vmatpush2.msra.mxu0 0.0
    %273 = vmatprep.subr.mxu0 0.0
    %274 = vmatpush2.msra.mxu0 0.0
    %275 = vmatprep.subr.mxu0 0.0
    %276 = vmatpush2.msra.mxu0 0.0
    %277 = vmatprep.subr.mxu0 0.0
    %278 = vmatpush2.msra.mxu0 0.0
    %279 = vmatprep.mubr.f32.mxu0 0.0
    %280 = vmatmul.mubr.f32.gmra.mxu0 %v72
    %v281 = vpop.f32.mrf.mxu0
    %v282 = vadd.f32 0.0, %v281
    %v283 = vpop.f32.mrf.mxu0
    %284 = vmatprep.mubr.f32.mxu0 0.0
    %285 = vmatmul.mubr.f32.gmra.mxu0 %v75
    %v286 = vpop.f32.mrf.mxu0
    %v287 = vadd.f32 0.0, %v286
    %v288 = vpop.f32.mrf.mxu0
    %289 = vmatprep.mubr.f32.mxu0 0.0
    %290 = vmatmul.mubr.f32.gmra.mxu0 %v78
    %v291 = vpop.f32.mrf.mxu0
    %v292 = vadd.f32 0.0, %v291
    %v293 = vpop.f32.mrf.mxu0
    %294 = vmatprep.mubr.f32.mxu0 0.0
    %295 = vmatmul.mubr.f32.gmra.mxu0 %v81
    %v296 = vpop.f32.mrf.mxu0
    %v297 = vadd.f32 0.0, %v296
    %v298 = vpop.f32.mrf.mxu0
    %299 = vmatprep.mubr.f32.mxu0 0.0
    %300 = vmatmul.mubr.f32.gmra.mxu0 %v84
    %v301 = vpop.f32.mrf.mxu0
    %v302 = vadd.f32 0.0, %v301
    %v303 = vpop.f32.mrf.mxu0
    %304 = vmatprep.mubr.f32.mxu0 0.0
    %305 = vmatmul.mubr.f32.gmra.mxu0 %v87
    %v306 = vpop.f32.mrf.mxu0
    %v307 = vadd.f32 0.0, %v306
    %v308 = vpop.f32.mrf.mxu0
    %309 = vmatprep.mubr.f32.mxu0 0.0
    %310 = vmatmul.mubr.f32.gmra.mxu0 %v90
    %v311 = vpop.f32.mrf.mxu0
    %v312 = vadd.f32 0.0, %v311
    %v313 = vpop.f32.mrf.mxu0
    %314 = vmatprep.mubr.f32.mxu0 0.0
    %315 = vmatmul.mubr.f32.gmra.mxu0 %v93
    %v316 = vpop.f32.mrf.mxu0
    %v317 = vadd.f32 0.0, %v316
    %v318 = vpop.f32.mrf.mxu0
    %319 = vmatprep.mubr.f32.mxu0 0.0
    %320 = vmatmul.mubr.f32.gmra.mxu0 %v96
    %v321 = vpop.f32.mrf.mxu0
    %v322 = vadd.f32 0.0, %v321
    %v323 = vpop.f32.mrf.mxu0
    %324 = vmatprep.mubr.f32.mxu0 0.0
    %325 = vmatmul.mubr.f32.gmra.mxu0 %v99
    %v326 = vpop.f32.mrf.mxu0
    %v327 = vadd.f32 0.0, %v326
    %v328 = vpop.f32.mrf.mxu0
    %329 = vmatprep.mubr.f32.mxu0 0.0
    %330 = vmatmul.mubr.f32.gmra.mxu0 %v102
    %v331 = vpop.f32.mrf.mxu0
    %v332 = vadd.f32 0.0, %v331
    %v333 = vpop.f32.mrf.mxu0
    %334 = vmatprep.mubr.f32.mxu0 0.0
    %335 = vmatmul.mubr.f32.gmra.mxu0 %v105
    %v336 = vpop.f32.mrf.mxu0
    %v337 = vadd.f32 0.0, %v336
    %v338 = vpop.f32.mrf.mxu0
    %339 = vmatprep.mubr.f32.mxu0 0.0
    %340 = vmatmul.mubr.f32.gmra.mxu0 %v108
    %v341 = vpop.f32.mrf.mxu0
    %v342 = vadd.f32 0.0, %v341
    %v343 = vpop.f32.mrf.mxu0
    %344 = vmatprep.mubr.f32.mxu0 0.0
    %345 = vmatmul.mubr.f32.gmra.mxu0 %v111
    %v346 = vpop.f32.mrf.mxu0
    %v347 = vadd.f32 0.0, %v346
    %v348 = vpop.f32.mrf.mxu0
    %349 = vmatprep.mubr.f32.mxu0 0.0
    %350 = vmatmul.mubr.f32.gmra.mxu0 %v114
    %v351 = vpop.f32.mrf.mxu0
    %v352 = vadd.f32 0.0, %v351
    %v353 = vpop.f32.mrf.mxu0
    %354 = vmatprep.mubr.f32.mxu0 0.0
    %355 = vmatmul.mubr.f32.gmra.mxu0 %v117
    %v356 = vpop.f32.mrf.mxu0
    %v357 = vadd.f32 0.0, %v356
    %v358 = vpop.f32.mrf.mxu0
    %359 = vmatprep.mubr.f32.mxu0 0.0
    %360 = vmatmul.mubr.f32.gmra.mxu0 %v120
    %v361 = vpop.f32.mrf.mxu0
    %v362 = vadd.f32 0.0, %v361
    %v363 = vpop.f32.mrf.mxu0
    %364 = vmatprep.mubr.f32.mxu0 0.0
    %365 = vmatmul.mubr.f32.gmra.mxu0 %v123
    %v366 = vpop.f32.mrf.mxu0
    %v367 = vadd.f32 0.0, %v366
    %v368 = vpop.f32.mrf.mxu0
    %369 = vmatprep.mubr.f32.mxu0 0.0
    %370 = vmatmul.mubr.f32.gmra.mxu0 %v126
    %v371 = vpop.f32.mrf.mxu0
    %v372 = vadd.f32 0.0, %v371
    %v373 = vpop.f32.mrf.mxu0
    %374 = vmatprep.mubr.f32.mxu0 0.0
    %375 = vmatmul.mubr.f32.gmra.mxu0 %v129
    %v376 = vpop.f32.mrf.mxu0
    %v377 = vadd.f32 0.0, %v376
    %v378 = vpop.f32.mrf.mxu0
    %379 = vmatprep.mubr.f32.mxu0 0.0
    %380 = vmatmul.mubr.f32.gmra.mxu0 %v132
    %v381 = vpop.f32.mrf.mxu0
    %v382 = vadd.f32 0.0, %v381
    %v383 = vpop.f32.mrf.mxu0
    %384 = vmatprep.mubr.f32.mxu0 0.0
    %385 = vmatmul.mubr.f32.gmra.mxu0 %v135
    %v386 = vpop.f32.mrf.mxu0
    %v387 = vadd.f32 0.0, %v386
    %v388 = vpop.f32.mrf.mxu0
    %389 = vmatprep.mubr.f32.mxu0 0.0
    %390 = vmatmul.mubr.f32.gmra.mxu0 %v138
    %v391 = vpop.f32.mrf.mxu0
    %v392 = vadd.f32 0.0, %v391
    %v393 = vpop.f32.mrf.mxu0
    %394 = vmatprep.mubr.f32.mxu0 0.0
    %395 = vmatmul.mubr.f32.gmra.mxu0 %v141
    %v396 = vpop.f32.mrf.mxu0
    %v397 = vadd.f32 0.0, %v396
    %v398 = vpop.f32.mrf.mxu0
    %399 = vmatprep.mubr.f32.mxu0 0.0
    %400 = vmatmul.mubr.f32.gmra.mxu0 %v144
    %v401 = vpop.f32.mrf.mxu0
    %v402 = vadd.f32 0.0, %v401
    %v403 = vpop.f32.mrf.mxu0
    %404 = vmatprep.mubr.f32.mxu0 0.0
    %405 = vmatmul.mubr.f32.gmra.mxu0 %v147
    %v406 = vpop.f32.mrf.mxu0
    %v407 = vadd.f32 0.0, %v406
    %v408 = vpop.f32.mrf.mxu0
    %409 = vmatprep.mubr.f32.mxu0 0.0
    %410 = vmatmul.mubr.f32.gmra.mxu0 %v150
    %v411 = vpop.f32.mrf.mxu0
    %v412 = vadd.f32 0.0, %v411
    %v413 = vpop.f32.mrf.mxu0
    %414 = vmatprep.mubr.f32.mxu0 0.0
    %415 = vmatmul.mubr.f32.gmra.mxu0 %v153
    %v416 = vpop.f32.mrf.mxu0
    %v417 = vadd.f32 0.0, %v416
    %v418 = vpop.f32.mrf.mxu0
    %419 = vmatprep.mubr.f32.mxu0 0.0
    %420 = vmatmul.mubr.f32.gmra.mxu0 %v156
    %v421 = vpop.f32.mrf.mxu0
    %v422 = vadd.f32 0.0, %v421
    %v423 = vpop.f32.mrf.mxu0
    %424 = vmatprep.mubr.f32.mxu0 0.0
    %425 = vmatmul.mubr.f32.gmra.mxu0 %v159
    %v426 = vpop.f32.mrf.mxu0
    %v427 = vadd.f32 0.0, %v426
    %v428 = vpop.f32.mrf.mxu0
    %429 = vmatprep.mubr.f32.mxu0 0.0
    %430 = vmatmul.mubr.f32.gmra.mxu0 %v162
    %v431 = vpop.f32.mrf.mxu0
    %v432 = vadd.f32 0.0, %v431
    %v433 = vpop.f32.mrf.mxu0
    %434 = vmatprep.mubr.f32.mxu0 0.0
    %435 = vmatmul.mubr.f32.gmra.mxu0 %v165
    %v436 = vpop.f32.mrf.mxu0
    %v437 = vadd.f32 0.0, %v436
    %v438 = vpop.f32.mrf.mxu0
    %439 = vmatprep.mubr.f32.mxu0 0.0
    %440 = vmatmul.mubr.f32.gmra.mxu0 %v168
    %v441 = vpop.f32.mrf.mxu0
    %v442 = vadd.f32 0.0, %v441
    %v443 = vpop.f32.mrf.mxu0
    %444 = vmatprep.mubr.f32.mxu0 0.0
    %445 = vmatmul.mubr.f32.gmra.mxu0 %v171
    %v446 = vpop.f32.mrf.mxu0
    %v447 = vadd.f32 0.0, %v446
    %v448 = vpop.f32.mrf.mxu0
    %449 = vmatprep.mubr.f32.mxu0 0.0
    %450 = vmatmul.mubr.f32.gmra.mxu0 %v174
    %v451 = vpop.f32.mrf.mxu0
    %v452 = vadd.f32 0.0, %v451
    %v453 = vpop.f32.mrf.mxu0
    %454 = vmatprep.mubr.f32.mxu0 0.0
    %455 = vmatmul.mubr.f32.gmra.mxu0 %v177
    %v456 = vpop.f32.mrf.mxu0
    %v457 = vadd.f32 0.0, %v456
    %v458 = vpop.f32.mrf.mxu0
    %459 = vmatprep.mubr.f32.mxu0 0.0
    %460 = vmatmul.mubr.f32.gmra.mxu0 %v180
    %v461 = vpop.f32.mrf.mxu0
    %v462 = vadd.f32 0.0, %v461
    %v463 = vpop.f32.mrf.mxu0
    %464 = vmatprep.mubr.f32.mxu0 0.0
    %465 = vmatmul.mubr.f32.gmra.mxu0 %v183
    %v466 = vpop.f32.mrf.mxu0
    %v467 = vadd.f32 0.0, %v466
    %v468 = vpop.f32.mrf.mxu0
    %469 = vmatprep.mubr.f32.mxu0 0.0
    %470 = vmatmul.mubr.f32.gmra.mxu0 %v186
    %v471 = vpop.f32.mrf.mxu0
    %v472 = vadd.f32 0.0, %v471
    %v473 = vpop.f32.mrf.mxu0
    %474 = vmatprep.mubr.f32.mxu0 0.0
    %475 = vmatmul.mubr.f32.gmra.mxu0 %v189
    %v476 = vpop.f32.mrf.mxu0
    %v477 = vadd.f32 0.0, %v476
    %v478 = vpop.f32.mrf.mxu0
    %479 = vmatprep.mubr.f32.mxu0 0.0
    %480 = vmatmul.mubr.f32.gmra.mxu0 %v192
    %v481 = vpop.f32.mrf.mxu0
    %v482 = vadd.f32 0.0, %v481
    %v483 = vpop.f32.mrf.mxu0
    %484 = vmatprep.mubr.f32.mxu0 0.0
    %485 = vmatmul.mubr.f32.gmra.mxu0 %v195
    %v486 = vpop.f32.mrf.mxu0
    %v487 = vadd.f32 0.0, %v486
    %v488 = vpop.f32.mrf.mxu0
    %489 = vmatprep.mubr.f32.mxu0 0.0
    %490 = vmatmul.mubr.f32.gmra.mxu0 %v198
    %v491 = vpop.f32.mrf.mxu0
    %v492 = vadd.f32 0.0, %v491
    %v493 = vpop.f32.mrf.mxu0
    %494 = vmatprep.mubr.f32.mxu0 0.0
    %495 = vmatmul.mubr.f32.gmra.mxu0 %v201
    %v496 = vpop.f32.mrf.mxu0
    %v497 = vadd.f32 0.0, %v496
    %v498 = vpop.f32.mrf.mxu0
    %499 = vmatprep.mubr.f32.mxu0 0.0
    %500 = vmatmul.mubr.f32.gmra.mxu0 %v204
    %v501 = vpop.f32.mrf.mxu0
    %v502 = vadd.f32 0.0, %v501
    %v503 = vpop.f32.mrf.mxu0
    %504 = vmatprep.mubr.f32.mxu0 0.0
    %505 = vmatmul.mubr.f32.gmra.mxu0 %v207
    %v506 = vpop.f32.mrf.mxu0
    %v507 = vadd.f32 0.0, %v506
    %v508 = vpop.f32.mrf.mxu0
    %509 = vmatprep.mubr.f32.mxu0 0.0
    %510 = vmatmul.mubr.f32.gmra.mxu0 %v210
    %v511 = vpop.f32.mrf.mxu0
    %v512 = vadd.f32 0.0, %v511
    %v513 = vpop.f32.mrf.mxu0
    %514 = vmatprep.mubr.f32.mxu0 0.0
    %515 = vmatmul.mubr.f32.gmra.mxu0 %v213
    %v516 = vpop.f32.mrf.mxu0
    %v517 = vadd.f32 0.0, %v516
    %v518 = vpop.f32.mrf.mxu0
    %519 = vdwg.mxu0
    %v520 = vpack.c.bf16 %v287, %v282
    %v521 = vpack.c.bf16 %v297, %v292
    %v522 = vpack.c.bf16 %v307, %v302
    %v523 = vpack.c.bf16 %v317, %v312
    %v524 = vpack.c.bf16 %v327, %v322
    %v525 = vpack.c.bf16 %v337, %v332
    %v526 = vpack.c.bf16 %v347, %v342
    %v527 = vpack.c.bf16 %v357, %v352
    %v528 = vpack.c.bf16 %v367, %v362
    %v529 = vpack.c.bf16 %v377, %v372
    %v530 = vpack.c.bf16 %v387, %v382
    %v531 = vpack.c.bf16 %v397, %v392
    %v532 = vpack.c.bf16 %v407, %v402
    %v533 = vpack.c.bf16 %v417, %v412
    %v534 = vpack.c.bf16 %v427, %v422
    %v535 = vpack.c.bf16 %v437, %v432
    %v536 = vpack.c.bf16 %v447, %v442
    %v537 = vpack.c.bf16 %v457, %v452
    %v538 = vpack.c.bf16 %v467, %v462
    %v539 = vpack.c.bf16 %v477, %v472
    %v540 = vpack.c.bf16 %v487, %v482
    %v541 = vpack.c.bf16 %v497, %v492
    %v542 = vpack.c.bf16 %v507, %v502
    %v543 = vpack.c.bf16 %v517, %v512
    %v568 = vunpack.c.l.b16 %v520
    %v569 = vunpack.c.h.b16 %v520
    %v570 = vunpack.c.l.b16 %v521
    %v571 = vunpack.c.h.b16 %v521
    %v572 = vunpack.c.l.b16 %v522
    %v573 = vunpack.c.h.b16 %v522
    %v574 = vunpack.c.l.b16 %v523
    %v575 = vunpack.c.h.b16 %v523
    %v576 = vunpack.c.l.b16 %v524
    %v577 = vunpack.c.h.b16 %v524
    %v578 = vunpack.c.l.b16 %v525
    %v579 = vunpack.c.h.b16 %v525
    %v580 = vunpack.c.l.b16 %v526
    %v581 = vunpack.c.h.b16 %v526
    %v582 = vunpack.c.l.b16 %v527
    %v583 = vunpack.c.h.b16 %v527
    %v584 = vunpack.c.l.b16 %v528
    %v585 = vunpack.c.h.b16 %v528
    %v586 = vunpack.c.l.b16 %v529
    %v587 = vunpack.c.h.b16 %v529
    %v588 = vunpack.c.l.b16 %v530
    %v589 = vunpack.c.h.b16 %v530
    %v590 = vunpack.c.l.b16 %v531
    %v591 = vunpack.c.h.b16 %v531
    %v592 = vunpack.c.l.b16 %v532
    %v593 = vunpack.c.h.b16 %v532
    %v594 = vunpack.c.l.b16 %v533
    %v595 = vunpack.c.h.b16 %v533
    %v596 = vunpack.c.l.b16 %v534
    %v597 = vunpack.c.h.b16 %v534
    %v598 = vunpack.c.l.b16 %v535
    %v599 = vunpack.c.h.b16 %v535
    %v600 = vunpack.c.l.b16 %v536
    %v601 = vunpack.c.h.b16 %v536
    %v602 = vunpack.c.l.b16 %v537
    %v603 = vunpack.c.h.b16 %v537
    %v604 = vunpack.c.l.b16 %v538
    %v605 = vunpack.c.h.b16 %v538
    %v606 = vunpack.c.l.b16 %v539
    %v607 = vunpack.c.h.b16 %v539
    %v608 = vunpack.c.l.b16 %v540
    %v609 = vunpack.c.h.b16 %v540
    %v610 = vunpack.c.l.b16 %v541
    %v611 = vunpack.c.h.b16 %v541
    %v612 = vunpack.c.l.b16 %v542
    %v613 = vunpack.c.h.b16 %v542
    %v614 = vunpack.c.l.b16 %v543
    %v615 = vunpack.c.h.b16 %v543
    %v616 = vpack.c.b16 %v568, %v568
    %v617 = vpack.c.b16 %v569, %v569
    %v618 = vpack.c.b16 %v570, %v570
    %v619 = vpack.c.b16 %v571, %v571
    %v620 = vpack.c.b16 %v572, %v572
    %v621 = vpack.c.b16 %v573, %v573
    %v622 = vpack.c.b16 %v574, %v574
    %v623 = vpack.c.b16 %v575, %v575
    %v624 = vpack.c.b16 %v576, %v576
    %v625 = vpack.c.b16 %v577, %v577
    %v626 = vpack.c.b16 %v578, %v578
    %v627 = vpack.c.b16 %v579, %v579
    %v628 = vpack.c.b16 %v580, %v580
    %v629 = vpack.c.b16 %v581, %v581
    %v630 = vpack.c.b16 %v582, %v582
    %v631 = vpack.c.b16 %v583, %v583
    %v632 = vpack.c.b16 %v584, %v584
    %v633 = vpack.c.b16 %v585, %v585
    %v634 = vpack.c.b16 %v586, %v586
    %v635 = vpack.c.b16 %v587, %v587
    %v636 = vpack.c.b16 %v588, %v588
    %v637 = vpack.c.b16 %v589, %v589
    %v638 = vpack.c.b16 %v590, %v590
    %v639 = vpack.c.b16 %v591, %v591
    %v640 = vpack.c.b16 %v592, %v592
    %v641 = vpack.c.b16 %v593, %v593
    %v642 = vpack.c.b16 %v594, %v594
    %v643 = vpack.c.b16 %v595, %v595
    %v644 = vpack.c.b16 %v596, %v596
    %v645 = vpack.c.b16 %v597, %v597
    %v646 = vpack.c.b16 %v598, %v598
    %v647 = vpack.c.b16 %v599, %v599
    %v648 = vpack.c.b16 %v600, %v600
    %v649 = vpack.c.b16 %v601, %v601
    %v650 = vpack.c.b16 %v602, %v602
    %v651 = vpack.c.b16 %v603, %v603
    %v652 = vpack.c.b16 %v604, %v604
    %v653 = vpack.c.b16 %v605, %v605
    %v654 = vpack.c.b16 %v606, %v606
    %v655 = vpack.c.b16 %v607, %v607
    %v656 = vpack.c.b16 %v608, %v608
    %v657 = vpack.c.b16 %v609, %v609
    %v658 = vpack.c.b16 %v610, %v610
    %v659 = vpack.c.b16 %v611, %v611
    %v660 = vpack.c.b16 %v612, %v612
    %v661 = vpack.c.b16 %v613, %v613
    %v662 = vpack.c.b16 %v614, %v614
    %v663 = vpack.c.b16 %v615, %v615
    %vm712 = vcmask 257024
    %713 = vst.msk [vmem:[%s4] sm:$0xf] %vm712, %v616
    %714 = vst.msk [vmem:[%s4 + $0x4] sm:$0xf] %vm712, %v617
    %715 = vst.msk [vmem:[%s4 + $0x8] sm:$0xf] %vm712, %v618
    %716 = vst.msk [vmem:[%s4 + $0xc] sm:$0xf] %vm712, %v619
    %717 = vst.msk [vmem:[%s4 + $0x10] sm:$0xf] %vm712, %v620
    %718 = vst.msk [vmem:[%s4 + $0x14] sm:$0xf] %vm712, %v621
    %719 = vst.msk [vmem:[%s4 + $0x18] sm:$0xf] %vm712, %v622
    %720 = vst.msk [vmem:[%s4 + $0x1c] sm:$0xf] %vm712, %v623
    %721 = vst.msk [vmem:[%s4 + $0x20] sm:$0xf] %vm712, %v624
    %722 = vst.msk [vmem:[%s4 + $0x24] sm:$0xf] %vm712, %v625
    %723 = vst.msk [vmem:[%s4 + $0x28] sm:$0xf] %vm712, %v626
    %724 = vst.msk [vmem:[%s4 + $0x2c] sm:$0xf] %vm712, %v627
    %725 = vst.msk [vmem:[%s4 + $0x30] sm:$0xf] %vm712, %v628
    %726 = vst.msk [vmem:[%s4 + $0x34] sm:$0xf] %vm712, %v629
    %727 = vst.msk [vmem:[%s4 + $0x38] sm:$0xf] %vm712, %v630
    %728 = vst.msk [vmem:[%s4 + $0x3c] sm:$0xf] %vm712, %v631
    %729 = vst.msk [vmem:[%s4 + $0x40] sm:$0xf] %vm712, %v632
    %730 = vst.msk [vmem:[%s4 + $0x44] sm:$0xf] %vm712, %v633
    %731 = vst.msk [vmem:[%s4 + $0x48] sm:$0xf] %vm712, %v634
    %732 = vst.msk [vmem:[%s4 + $0x4c] sm:$0xf] %vm712, %v635
    %733 = vst.msk [vmem:[%s4 + $0x50] sm:$0xf] %vm712, %v636
    %734 = vst.msk [vmem:[%s4 + $0x54] sm:$0xf] %vm712, %v637
    %735 = vst.msk [vmem:[%s4 + $0x58] sm:$0xf] %vm712, %v638
    %736 = vst.msk [vmem:[%s4 + $0x5c] sm:$0xf] %vm712, %v639
    %737 = vst.msk [vmem:[%s4 + $0x60] sm:$0xf] %vm712, %v640
    %738 = vst.msk [vmem:[%s4 + $0x64] sm:$0xf] %vm712, %v641
    %739 = vst.msk [vmem:[%s4 + $0x68] sm:$0xf] %vm712, %v642
    %740 = vst.msk [vmem:[%s4 + $0x6c] sm:$0xf] %vm712, %v643
    %741 = vst.msk [vmem:[%s4 + $0x70] sm:$0xf] %vm712, %v644
    %742 = vst.msk [vmem:[%s4 + $0x74] sm:$0xf] %vm712, %v645
    %743 = vst.msk [vmem:[%s4 + $0x78] sm:$0xf] %vm712, %v646
    %744 = vst.msk [vmem:[%s4 + $0x7c] sm:$0xf] %vm712, %v647
    %745 = vst.msk [vmem:[%s4 + $0x80] sm:$0xf] %vm712, %v648
    %746 = vst.msk [vmem:[%s4 + $0x84] sm:$0xf] %vm712, %v649
    %747 = vst.msk [vmem:[%s4 + $0x88] sm:$0xf] %vm712, %v650
    %748 = vst.msk [vmem:[%s4 + $0x8c] sm:$0xf] %vm712, %v651
    %749 = vst.msk [vmem:[%s4 + $0x90] sm:$0xf] %vm712, %v652
    %750 = vst.msk [vmem:[%s4 + $0x94] sm:$0xf] %vm712, %v653
    %751 = vst.msk [vmem:[%s4 + $0x98] sm:$0xf] %vm712, %v654
    %752 = vst.msk [vmem:[%s4 + $0x9c] sm:$0xf] %vm712, %v655
    %753 = vst.msk [vmem:[%s4 + $0xa0] sm:$0xf] %vm712, %v656
    %754 = vst.msk [vmem:[%s4 + $0xa4] sm:$0xf] %vm712, %v657
    %755 = vst.msk [vmem:[%s4 + $0xa8] sm:$0xf] %vm712, %v658
    %756 = vst.msk [vmem:[%s4 + $0xac] sm:$0xf] %vm712, %v659
    %757 = vst.msk [vmem:[%s4 + $0xb0] sm:$0xf] %vm712, %v660
    %758 = vst.msk [vmem:[%s4 + $0xb4] sm:$0xf] %vm712, %v661
    %759 = vst.msk [vmem:[%s4 + $0xb8] sm:$0xf] %vm712, %v662
    %760 = vst.msk [vmem:[%s4 + $0xbc] sm:$0xf] %vm712, %v663
    %v761 = vld [vmem:[%s2] sm:$0x1]
    %vm762 = vcmask 261120
    %v764 = vsel %vm762, %v761, 0
    %v767 = vsel %vm762, %v282, 0
    %v770 = vsel %vm762, %v287, 0
    %v773 = vsel %vm762, %v292, 0
    %v776 = vsel %vm762, %v297, 0
    %v779 = vsel %vm762, %v302, 0
    %v782 = vsel %vm762, %v307, 0
    %v785 = vsel %vm762, %v312, 0
    %v788 = vsel %vm762, %v317, 0
    %v791 = vsel %vm762, %v322, 0
    %v794 = vsel %vm762, %v327, 0
    %v797 = vsel %vm762, %v332, 0
    %v800 = vsel %vm762, %v337, 0
    %v803 = vsel %vm762, %v342, 0
    %v806 = vsel %vm762, %v347, 0
    %v809 = vsel %vm762, %v352, 0
    %v812 = vsel %vm762, %v357, 0
    %v815 = vsel %vm762, %v362, 0
    %v818 = vsel %vm762, %v367, 0
    %v821 = vsel %vm762, %v372, 0
    %v824 = vsel %vm762, %v377, 0
    %v827 = vsel %vm762, %v382, 0
    %v830 = vsel %vm762, %v387, 0
    %v833 = vsel %vm762, %v392, 0
    %v836 = vsel %vm762, %v397, 0
    %v839 = vsel %vm762, %v402, 0
    %v842 = vsel %vm762, %v407, 0
    %v845 = vsel %vm762, %v412, 0
    %v848 = vsel %vm762, %v417, 0
    %v851 = vsel %vm762, %v422, 0
    %v854 = vsel %vm762, %v427, 0
    %v857 = vsel %vm762, %v432, 0
    %v860 = vsel %vm762, %v437, 0
    %v863 = vsel %vm762, %v442, 0
    %v866 = vsel %vm762, %v447, 0
    %v869 = vsel %vm762, %v452, 0
    %v872 = vsel %vm762, %v457, 0
    %v875 = vsel %vm762, %v462, 0
    %v878 = vsel %vm762, %v467, 0
    %v881 = vsel %vm762, %v472, 0
    %v884 = vsel %vm762, %v477, 0
    %v887 = vsel %vm762, %v482, 0
    %v890 = vsel %vm762, %v487, 0
    %v893 = vsel %vm762, %v492, 0
    %v896 = vsel %vm762, %v497, 0
    %v899 = vsel %vm762, %v502, 0
    %v902 = vsel %vm762, %v507, 0
    %v905 = vsel %vm762, %v512, 0
    %v908 = vsel %vm762, %v517, 0
    %910 = vmatprep.subr.mxu0 0.0
    %911 = vmatpush1.xpose.msra.mxu0 %v812
    %912 = vmatprep.subr.mxu0 0.0
    %913 = vmatpush1.xpose.msra.mxu0 %v809
    %914 = vmatprep.subr.mxu0 0.0
    %915 = vmatpush1.xpose.msra.mxu0 %v806
    %916 = vmatprep.subr.mxu0 0.0
    %917 = vmatpush1.xpose.msra.mxu0 %v803
    %918 = vmatprep.subr.mxu0 0.0
    %919 = vmatpush1.xpose.msra.mxu0 %v800
    %920 = vmatprep.subr.mxu0 0.0
    %921 = vmatpush1.xpose.msra.mxu0 %v797
    %922 = vmatprep.subr.mxu0 0.0
    %923 = vmatpush1.xpose.msra.mxu0 %v794
    %924 = vmatprep.subr.mxu0 0.0
    %925 = vmatpush1.xpose.msra.mxu0 %v791
    %926 = vmatprep.subr.mxu0 0.0
    %927 = vmatpush1.xpose.msra.mxu0 %v788
    %928 = vmatprep.subr.mxu0 0.0
    %929 = vmatpush1.xpose.msra.mxu0 %v785
    %930 = vmatprep.subr.mxu0 0.0
    %931 = vmatpush1.xpose.msra.mxu0 %v782
    %932 = vmatprep.subr.mxu0 0.0
    %933 = vmatpush1.xpose.msra.mxu0 %v779
    %934 = vmatprep.subr.mxu0 0.0
    %935 = vmatpush1.xpose.msra.mxu0 %v776
    %936 = vmatprep.subr.mxu0 0.0
    %937 = vmatpush1.xpose.msra.mxu0 %v773
    %938 = vmatprep.subr.mxu0 0.0
    %939 = vmatpush1.xpose.msra.mxu0 %v770
    %940 = vmatprep.subr.mxu0 0.0
    %941 = vmatpush1.xpose.msra.mxu0 %v767
    %942 = vmatprep.subr.mxu0 0.0
    %943 = vmatpush2.xpose.msra.mxu0 %v860
    %944 = vmatprep.subr.mxu0 0.0
    %945 = vmatpush2.xpose.msra.mxu0 %v857
    %946 = vmatprep.subr.mxu0 0.0
    %947 = vmatpush2.xpose.msra.mxu0 %v854
    %948 = vmatprep.subr.mxu0 0.0
    %949 = vmatpush2.xpose.msra.mxu0 %v851
    %950 = vmatprep.subr.mxu0 0.0
    %951 = vmatpush2.xpose.msra.mxu0 %v848
    %952 = vmatprep.subr.mxu0 0.0
    %953 = vmatpush2.xpose.msra.mxu0 %v845
    %954 = vmatprep.subr.mxu0 0.0
    %955 = vmatpush2.xpose.msra.mxu0 %v842
    %956 = vmatprep.subr.mxu0 0.0
    %957 = vmatpush2.xpose.msra.mxu0 %v839
    %958 = vmatprep.subr.mxu0 0.0
    %959 = vmatpush2.xpose.msra.mxu0 %v836
    %960 = vmatprep.subr.mxu0 0.0
    %961 = vmatpush2.xpose.msra.mxu0 %v833
    %962 = vmatprep.subr.mxu0 0.0
    %963 = vmatpush2.xpose.msra.mxu0 %v830
    %964 = vmatprep.subr.mxu0 0.0
    %965 = vmatpush2.xpose.msra.mxu0 %v827
    %966 = vmatprep.subr.mxu0 0.0
    %967 = vmatpush2.xpose.msra.mxu0 %v824
    %968 = vmatprep.subr.mxu0 0.0
    %969 = vmatpush2.xpose.msra.mxu0 %v821
    %970 = vmatprep.subr.mxu0 0.0
    %971 = vmatpush2.xpose.msra.mxu0 %v818
    %972 = vmatprep.subr.mxu0 0.0
    %973 = vmatpush2.xpose.msra.mxu0 %v815
    %974 = vmatprep.mubr.f32.mxu0 0.0
    %975 = vmatmul.mubr.f32.gmra.mxu0 %v764
    %v976 = vpop.f32.mrf.mxu0
    %v977 = vadd.f32 0.0, %v976
    %v978 = vpop.f32.mrf.mxu0
    %v979 = vadd.f32 0.0, %v978
    %980 = vdwg.mxu0
    %981 = vmatprep.subr.mxu0 0.0
    %982 = vmatpush1.xpose.msra.mxu0 %v908
    %983 = vmatprep.subr.mxu0 0.0
    %984 = vmatpush1.xpose.msra.mxu0 %v905
    %985 = vmatprep.subr.mxu0 0.0
    %986 = vmatpush1.xpose.msra.mxu0 %v902
    %987 = vmatprep.subr.mxu0 0.0
    %988 = vmatpush1.xpose.msra.mxu0 %v899
    %989 = vmatprep.subr.mxu0 0.0
    %990 = vmatpush1.xpose.msra.mxu0 %v896
    %991 = vmatprep.subr.mxu0 0.0
    %992 = vmatpush1.xpose.msra.mxu0 %v893
    %993 = vmatprep.subr.mxu0 0.0
    %994 = vmatpush1.xpose.msra.mxu0 %v890
    %995 = vmatprep.subr.mxu0 0.0
    %996 = vmatpush1.xpose.msra.mxu0 %v887
    %997 = vmatprep.subr.mxu0 0.0
    %998 = vmatpush1.xpose.msra.mxu0 %v884
    %999 = vmatprep.subr.mxu0 0.0
    %1000 = vmatpush1.xpose.msra.mxu0 %v881
    %1001 = vmatprep.subr.mxu0 0.0
    %1002 = vmatpush1.xpose.msra.mxu0 %v878
    %1003 = vmatprep.subr.mxu0 0.0
    %1004 = vmatpush1.xpose.msra.mxu0 %v875
    %1005 = vmatprep.subr.mxu0 0.0
    %1006 = vmatpush1.xpose.msra.mxu0 %v872
    %1007 = vmatprep.subr.mxu0 0.0
    %1008 = vmatpush1.xpose.msra.mxu0 %v869
    %1009 = vmatprep.subr.mxu0 0.0
    %1010 = vmatpush1.xpose.msra.mxu0 %v866
    %1011 = vmatprep.subr.mxu0 0.0
    %1012 = vmatpush1.xpose.msra.mxu0 %v863
    %1013 = vmatprep.subr.mxu0 0.0
    %1014 = vmatpush2.xpose.msra.mxu0 0.0
    %1015 = vmatprep.subr.mxu0 0.0
    %1016 = vmatpush2.xpose.msra.mxu0 0.0
    %1017 = vmatprep.subr.mxu0 0.0
    %1018 = vmatpush2.xpose.msra.mxu0 0.0
    %1019 = vmatprep.subr.mxu0 0.0
    %1020 = vmatpush2.xpose.msra.mxu0 0.0
    %1021 = vmatprep.subr.mxu0 0.0
    %1022 = vmatpush2.xpose.msra.mxu0 0.0
    %1023 = vmatprep.subr.mxu0 0.0
    %1024 = vmatpush2.xpose.msra.mxu0 0.0
    %1025 = vmatprep.subr.mxu0 0.0
    %1026 = vmatpush2.xpose.msra.mxu0 0.0
    %1027 = vmatprep.subr.mxu0 0.0
    %1028 = vmatpush2.xpose.msra.mxu0 0.0
    %1029 = vmatprep.subr.mxu0 0.0
    %1030 = vmatpush2.xpose.msra.mxu0 0.0
    %1031 = vmatprep.subr.mxu0 0.0
    %1032 = vmatpush2.xpose.msra.mxu0 0.0
    %1033 = vmatprep.subr.mxu0 0.0
    %1034 = vmatpush2.xpose.msra.mxu0 0.0
    %1035 = vmatprep.subr.mxu0 0.0
    %1036 = vmatpush2.xpose.msra.mxu0 0.0
    %1037 = vmatprep.subr.mxu0 0.0
    %1038 = vmatpush2.xpose.msra.mxu0 0.0
    %1039 = vmatprep.subr.mxu0 0.0
    %1040 = vmatpush2.xpose.msra.mxu0 0.0
    %1041 = vmatprep.subr.mxu0 0.0
    %1042 = vmatpush2.xpose.msra.mxu0 0.0
    %1043 = vmatprep.subr.mxu0 0.0
    %1044 = vmatpush2.xpose.msra.mxu0 0.0
    %1045 = vmatprep.mubr.f32.mxu0 0.0
    %1046 = vmatmul.mubr.f32.gmra.mxu0 %v764
    %v1047 = vpop.f32.mrf.mxu0
    %v1048 = vadd.f32 0.0, %v1047
    %v1049 = vpop.f32.mrf.mxu0
    %1050 = vdwg.mxu0
    %v1054 = vcombine.low %v977, %v979
    %v1056 = vunpack.c.l.s4 1966171168
    %v1057 = vunpack.c.0.s8 %v1056
    %v1058 = vlaneseq
    %v1059 = vshrl.u32 %v1058, 7
    %v1060 = vsub.s32 %v1057, %v1059
    %v1061 = vrot.slane %v1054, %v1060
    %v1063 = vunpack.c.l.s4 1966171168
    %v1064 = vunpack.c.0.s8 %v1063
    %v1065 = vlaneseq
    %v1066 = vshrl.u32 %v1065, 7
    %v1067 = vsub.s32 %v1064, %v1066
    %v1068 = vrot.slane %v1048, %v1067
    %v1069 = vcombine.low %v1061, %v1068
    %v1071 = vunpack.c.l.s4 1966171168
    %v1072 = vunpack.c.0.s8 %v1071
    %v1073 = vlaneseq
    %v1074 = vshrl.u32 %v1073, 7
    %v1075 = vsub.s32 %v1072, %v1074
    %v1076 = vrot.slane %v1069, %v1075
    %v1078 = vlaneseq
    %vm1079 = vcmp.ge.s32.totalorder %v1078, 0
    %vm1080 = vcmp.lt.s32.totalorder %v1078, 384
    %vm1081 = vmand %vm1079, %vm1080
    %1082 = vst.msk [vmem:[#allocation2] sm:$0x7] %vm1081, %v1076
    %v1083 = vld [vmem:[%s3] sm:$0x1]
    %v1085 = vlaneseq
    %v1086 = vshrl.u32 %v1085, 7
    %v1087 = vsub.s32 0, %v1086
    %v1088 = vrot.slane %v1083, %v1087
    %v1090 = vmul.f32 %v282, %v1088
    %v1091 = vmul.f32 %v287, %v1088
    %v1092 = vmul.f32 %v292, %v1088
    %v1093 = vmul.f32 %v297, %v1088
    %v1094 = vmul.f32 %v302, %v1088
    %v1095 = vmul.f32 %v307, %v1088
    %v1096 = vmul.f32 %v312, %v1088
    %v1097 = vmul.f32 %v317, %v1088
    %v1098 = vmul.f32 %v322, %v1088
    %v1099 = vmul.f32 %v327, %v1088
    %v1100 = vmul.f32 %v332, %v1088
    %v1101 = vmul.f32 %v337, %v1088
    %v1102 = vmul.f32 %v342, %v1088
    %v1103 = vmul.f32 %v347, %v1088
    %v1104 = vmul.f32 %v352, %v1088
    %v1105 = vmul.f32 %v357, %v1088
    %v1106 = vmul.f32 %v362, %v1088
    %v1107 = vmul.f32 %v367, %v1088
    %v1108 = vmul.f32 %v372, %v1088
    %v1109 = vmul.f32 %v377, %v1088
    %v1110 = vmul.f32 %v382, %v1088
    %v1111 = vmul.f32 %v387, %v1088
    %v1112 = vmul.f32 %v392, %v1088
    %v1113 = vmul.f32 %v397, %v1088
    %v1114 = vmul.f32 %v402, %v1088
    %v1115 = vmul.f32 %v407, %v1088
    %v1116 = vmul.f32 %v412, %v1088
    %v1117 = vmul.f32 %v417, %v1088
    %v1118 = vmul.f32 %v422, %v1088
    %v1119 = vmul.f32 %v427, %v1088
    %v1120 = vmul.f32 %v432, %v1088
    %v1121 = vmul.f32 %v437, %v1088
    %v1122 = vmul.f32 %v442, %v1088
    %v1123 = vmul.f32 %v447, %v1088
    %v1124 = vmul.f32 %v452, %v1088
    %v1125 = vmul.f32 %v457, %v1088
    %v1126 = vmul.f32 %v462, %v1088
    %v1127 = vmul.f32 %v467, %v1088
    %v1128 = vmul.f32 %v472, %v1088
    %v1129 = vmul.f32 %v477, %v1088
    %v1130 = vmul.f32 %v482, %v1088
    %v1131 = vmul.f32 %v487, %v1088
    %v1132 = vmul.f32 %v492, %v1088
    %v1133 = vmul.f32 %v497, %v1088
    %v1134 = vmul.f32 %v502, %v1088
    %v1135 = vmul.f32 %v507, %v1088
    %v1136 = vmul.f32 %v512, %v1088
    %v1137 = vmul.f32 %v517, %v1088
    %v1138 = vsel %vm762, %v1090, 0.0
    %1139 = vadd.xlane.f32.xlu0 %v1138
    %v1140 = vpop.xlane.xlu0 %1139
    %v1141 = vsel %vm762, %v1091, 0.0
    %1142 = vadd.xlane.f32.xlu0 %v1141
    %v1143 = vpop.xlane.xlu0 %1142
    %v1144 = vsel %vm762, %v1092, 0.0
    %1145 = vadd.xlane.f32.xlu0 %v1144
    %v1146 = vpop.xlane.xlu0 %1145
    %v1147 = vsel %vm762, %v1093, 0.0
    %1148 = vadd.xlane.f32.xlu0 %v1147
    %v1149 = vpop.xlane.xlu0 %1148
    %v1150 = vsel %vm762, %v1094, 0.0
    %1151 = vadd.xlane.f32.xlu0 %v1150
    %v1152 = vpop.xlane.xlu0 %1151
    %v1153 = vsel %vm762, %v1095, 0.0
    %1154 = vadd.xlane.f32.xlu0 %v1153
    %v1155 = vpop.xlane.xlu0 %1154
    %v1156 = vsel %vm762, %v1096, 0.0
    %1157 = vadd.xlane.f32.xlu0 %v1156
    %v1158 = vpop.xlane.xlu0 %1157
    %v1159 = vsel %vm762, %v1097, 0.0
    %1160 = vadd.xlane.f32.xlu0 %v1159
    %v1161 = vpop.xlane.xlu0 %1160
    %v1162 = vsel %vm762, %v1098, 0.0
    %1163 = vadd.xlane.f32.xlu0 %v1162
    %v1164 = vpop.xlane.xlu0 %1163
    %v1165 = vsel %vm762, %v1099, 0.0
    %1166 = vadd.xlane.f32.xlu0 %v1165
    %v1167 = vpop.xlane.xlu0 %1166
    %v1168 = vsel %vm762, %v1100, 0.0
    %1169 = vadd.xlane.f32.xlu0 %v1168
    %v1170 = vpop.xlane.xlu0 %1169
    %v1171 = vsel %vm762, %v1101, 0.0
    %1172 = vadd.xlane.f32.xlu0 %v1171
    %v1173 = vpop.xlane.xlu0 %1172
    %v1174 = vsel %vm762, %v1102, 0.0
    %1175 = vadd.xlane.f32.xlu0 %v1174
    %v1176 = vpop.xlane.xlu0 %1175
    %v1177 = vsel %vm762, %v1103, 0.0
    %1178 = vadd.xlane.f32.xlu0 %v1177
    %v1179 = vpop.xlane.xlu0 %1178
    %v1180 = vsel %vm762, %v1104, 0.0
    %1181 = vadd.xlane.f32.xlu0 %v1180
    %v1182 = vpop.xlane.xlu0 %1181
    %v1183 = vsel %vm762, %v1105, 0.0
    %1184 = vadd.xlane.f32.xlu0 %v1183
    %v1185 = vpop.xlane.xlu0 %1184
    %v1186 = vsel %vm762, %v1106, 0.0
    %1187 = vadd.xlane.f32.xlu0 %v1186
    %v1188 = vpop.xlane.xlu0 %1187
    %v1189 = vsel %vm762, %v1107, 0.0
    %1190 = vadd.xlane.f32.xlu0 %v1189
    %v1191 = vpop.xlane.xlu0 %1190
    %v1192 = vsel %vm762, %v1108, 0.0
    %1193 = vadd.xlane.f32.xlu0 %v1192
    %v1194 = vpop.xlane.xlu0 %1193
    %v1195 = vsel %vm762, %v1109, 0.0
    %1196 = vadd.xlane.f32.xlu0 %v1195
    %v1197 = vpop.xlane.xlu0 %1196
    %v1198 = vsel %vm762, %v1110, 0.0
    %1199 = vadd.xlane.f32.xlu0 %v1198
    %v1200 = vpop.xlane.xlu0 %1199
    %v1201 = vsel %vm762, %v1111, 0.0
    %1202 = vadd.xlane.f32.xlu0 %v1201
    %v1203 = vpop.xlane.xlu0 %1202
    %v1204 = vsel %vm762, %v1112, 0.0
    %1205 = vadd.xlane.f32.xlu0 %v1204
    %v1206 = vpop.xlane.xlu0 %1205
    %v1207 = vsel %vm762, %v1113, 0.0
    %1208 = vadd.xlane.f32.xlu0 %v1207
    %v1209 = vpop.xlane.xlu0 %1208
    %v1210 = vsel %vm762, %v1114, 0.0
    %1211 = vadd.xlane.f32.xlu0 %v1210
    %v1212 = vpop.xlane.xlu0 %1211
    %v1213 = vsel %vm762, %v1115, 0.0
    %1214 = vadd.xlane.f32.xlu0 %v1213
    %v1215 = vpop.xlane.xlu0 %1214
    %v1216 = vsel %vm762, %v1116, 0.0
    %1217 = vadd.xlane.f32.xlu0 %v1216
    %v1218 = vpop.xlane.xlu0 %1217
    %v1219 = vsel %vm762, %v1117, 0.0
    %1220 = vadd.xlane.f32.xlu0 %v1219
    %v1221 = vpop.xlane.xlu0 %1220
    %v1222 = vsel %vm762, %v1118, 0.0
    %1223 = vadd.xlane.f32.xlu0 %v1222
    %v1224 = vpop.xlane.xlu0 %1223
    %v1225 = vsel %vm762, %v1119, 0.0
    %1226 = vadd.xlane.f32.xlu0 %v1225
    %v1227 = vpop.xlane.xlu0 %1226
    %v1228 = vsel %vm762, %v1120, 0.0
    %1229 = vadd.xlane.f32.xlu0 %v1228
    %v1230 = vpop.xlane.xlu0 %1229
    %v1231 = vsel %vm762, %v1121, 0.0
    %1232 = vadd.xlane.f32.xlu0 %v1231
    %v1233 = vpop.xlane.xlu0 %1232
    %v1234 = vsel %vm762, %v1122, 0.0
    %1235 = vadd.xlane.f32.xlu0 %v1234
    %v1236 = vpop.xlane.xlu0 %1235
    %v1237 = vsel %vm762, %v1123, 0.0
    %1238 = vadd.xlane.f32.xlu0 %v1237
    %v1239 = vpop.xlane.xlu0 %1238
    %v1240 = vsel %vm762, %v1124, 0.0
    %1241 = vadd.xlane.f32.xlu0 %v1240
    %v1242 = vpop.xlane.xlu0 %1241
    %v1243 = vsel %vm762, %v1125, 0.0
    %1244 = vadd.xlane.f32.xlu0 %v1243
    %v1245 = vpop.xlane.xlu0 %1244
    %v1246 = vsel %vm762, %v1126, 0.0
    %1247 = vadd.xlane.f32.xlu0 %v1246
    %v1248 = vpop.xlane.xlu0 %1247
    %v1249 = vsel %vm762, %v1127, 0.0
    %1250 = vadd.xlane.f32.xlu0 %v1249
    %v1251 = vpop.xlane.xlu0 %1250
    %v1252 = vsel %vm762, %v1128, 0.0
    %1253 = vadd.xlane.f32.xlu0 %v1252
    %v1254 = vpop.xlane.xlu0 %1253
    %v1255 = vsel %vm762, %v1129, 0.0
    %1256 = vadd.xlane.f32.xlu0 %v1255
    %v1257 = vpop.xlane.xlu0 %1256
    %v1258 = vsel %vm762, %v1130, 0.0
    %1259 = vadd.xlane.f32.xlu0 %v1258
    %v1260 = vpop.xlane.xlu0 %1259
    %v1261 = vsel %vm762, %v1131, 0.0
    %1262 = vadd.xlane.f32.xlu0 %v1261
    %v1263 = vpop.xlane.xlu0 %1262
    %v1264 = vsel %vm762, %v1132, 0.0
    %1265 = vadd.xlane.f32.xlu0 %v1264
    %v1266 = vpop.xlane.xlu0 %1265
    %v1267 = vsel %vm762, %v1133, 0.0
    %1268 = vadd.xlane.f32.xlu0 %v1267
    %v1269 = vpop.xlane.xlu0 %1268
    %v1270 = vsel %vm762, %v1134, 0.0
    %1271 = vadd.xlane.f32.xlu0 %v1270
    %v1272 = vpop.xlane.xlu0 %1271
    %v1273 = vsel %vm762, %v1135, 0.0
    %1274 = vadd.xlane.f32.xlu0 %v1273
    %v1275 = vpop.xlane.xlu0 %1274
    %v1276 = vsel %vm762, %v1136, 0.0
    %1277 = vadd.xlane.f32.xlu0 %v1276
    %v1278 = vpop.xlane.xlu0 %1277
    %v1279 = vsel %vm762, %v1137, 0.0
    %1280 = vadd.xlane.f32.xlu0 %v1279
    %v1281 = vpop.xlane.xlu0 %1280
    %vm1282 = vcmask 7168
    %1283 = vst.msk [vmem:[%s6] sm:$0xff] %vm1282, %v1140
    %1284 = vst.msk [vmem:[%s6 + $0x8] sm:$0xff] %vm1282, %v1143
    %1285 = vst.msk [vmem:[%s6 + $0x10] sm:$0xff] %vm1282, %v1146
    %1286 = vst.msk [vmem:[%s6 + $0x18] sm:$0xff] %vm1282, %v1149
    %1287 = vst.msk [vmem:[%s6 + $0x20] sm:$0xff] %vm1282, %v1152
    %1288 = vst.msk [vmem:[%s6 + $0x28] sm:$0xff] %vm1282, %v1155
    %1289 = vst.msk [vmem:[%s6 + $0x30] sm:$0xff] %vm1282, %v1158
    %1290 = vst.msk [vmem:[%s6 + $0x38] sm:$0xff] %vm1282, %v1161
    %1291 = vst.msk [vmem:[%s6 + $0x40] sm:$0xff] %vm1282, %v1164
    %1292 = vst.msk [vmem:[%s6 + $0x48] sm:$0xff] %vm1282, %v1167
    %1293 = vst.msk [vmem:[%s6 + $0x50] sm:$0xff] %vm1282, %v1170
    %1294 = vst.msk [vmem:[%s6 + $0x58] sm:$0xff] %vm1282, %v1173
    %1295 = vst.msk [vmem:[%s6 + $0x60] sm:$0xff] %vm1282, %v1176
    %1296 = vst.msk [vmem:[%s6 + $0x68] sm:$0xff] %vm1282, %v1179
    %1297 = vst.msk [vmem:[%s6 + $0x70] sm:$0xff] %vm1282, %v1182
    %1298 = vst.msk [vmem:[%s6 + $0x78] sm:$0xff] %vm1282, %v1185
    %1299 = vst.msk [vmem:[%s6 + $0x80] sm:$0xff] %vm1282, %v1188
    %1300 = vst.msk [vmem:[%s6 + $0x88] sm:$0xff] %vm1282, %v1191
    %1301 = vst.msk [vmem:[%s6 + $0x90] sm:$0xff] %vm1282, %v1194
    %1302 = vst.msk [vmem:[%s6 + $0x98] sm:$0xff] %vm1282, %v1197
    %1303 = vst.msk [vmem:[%s6 + $0xa0] sm:$0xff] %vm1282, %v1200
    %1304 = vst.msk [vmem:[%s6 + $0xa8] sm:$0xff] %vm1282, %v1203
    %1305 = vst.msk [vmem:[%s6 + $0xb0] sm:$0xff] %vm1282, %v1206
    %1306 = vst.msk [vmem:[%s6 + $0xb8] sm:$0xff] %vm1282, %v1209
    %1307 = vst.msk [vmem:[%s6 + $0xc0] sm:$0xff] %vm1282, %v1212
    %1308 = vst.msk [vmem:[%s6 + $0xc8] sm:$0xff] %vm1282, %v1215
    %1309 = vst.msk [vmem:[%s6 + $0xd0] sm:$0xff] %vm1282, %v1218
    %1310 = vst.msk [vmem:[%s6 + $0xd8] sm:$0xff] %vm1282, %v1221
    %1311 = vst.msk [vmem:[%s6 + $0xe0] sm:$0xff] %vm1282, %v1224
    %1312 = vst.msk [vmem:[%s6 + $0xe8] sm:$0xff] %vm1282, %v1227
    %1313 = vst.msk [vmem:[%s6 + $0xf0] sm:$0xff] %vm1282, %v1230
    %1314 = vst.msk [vmem:[%s6 + $0xf8] sm:$0xff] %vm1282, %v1233
    %1315 = vst.msk [vmem:[%s6 + $0x100] sm:$0xff] %vm1282, %v1236
    %1316 = vst.msk [vmem:[%s6 + $0x108] sm:$0xff] %vm1282, %v1239
    %1317 = vst.msk [vmem:[%s6 + $0x110] sm:$0xff] %vm1282, %v1242
    %1318 = vst.msk [vmem:[%s6 + $0x118] sm:$0xff] %vm1282, %v1245
    %1319 = vst.msk [vmem:[%s6 + $0x120] sm:$0xff] %vm1282, %v1248
    %1320 = vst.msk [vmem:[%s6 + $0x128] sm:$0xff] %vm1282, %v1251
    %1321 = vst.msk [vmem:[%s6 + $0x130] sm:$0xff] %vm1282, %v1254
    %1322 = vst.msk [vmem:[%s6 + $0x138] sm:$0xff] %vm1282, %v1257
    %1323 = vst.msk [vmem:[%s6 + $0x140] sm:$0xff] %vm1282, %v1260
    %1324 = vst.msk [vmem:[%s6 + $0x148] sm:$0xff] %vm1282, %v1263
    %1325 = vst.msk [vmem:[%s6 + $0x150] sm:$0xff] %vm1282, %v1266
    %1326 = vst.msk [vmem:[%s6 + $0x158] sm:$0xff] %vm1282, %v1269
    %1327 = vst.msk [vmem:[%s6 + $0x160] sm:$0xff] %vm1282, %v1272
    %1328 = vst.msk [vmem:[%s6 + $0x168] sm:$0xff] %vm1282, %v1275
    %1329 = vst.msk [vmem:[%s6 + $0x170] sm:$0xff] %vm1282, %v1278
    %1330 = vst.msk [vmem:[%s6 + $0x178] sm:$0xff] %vm1282, %v1281
    // Predicated region
    $region18: #{tpu_custom_call.1} parent=1 // pred_check
      _
    $region19: #{tpu_custom_call.1} parent=1 // pred_check_branch
      %1332 = sbr.rel (0) target = $region21
    $region20: #{tpu_custom_call.1} parent=1 // pred_region
      _
    $region21: #{tpu_custom_call.1} parent=1 // pred_fallthru
      _
    // Predicated region
    $region22: #{tpu_custom_call.1} parent=1 // pred_check
      _
    $region23: #{tpu_custom_call.1} parent=1 // pred_check_branch
      %1334 = sbr.rel (0) target = $region25
    $region24: #{tpu_custom_call.1} parent=1 // pred_region
      %s1336 = ssub.s32 48, 48
      %1337 = vsyncadd [#allocation3], %s1336
      %s1339 = sshll.u32 [#allocation2], 4
      %s1340 = int_to_ptr.vmem [resolvable:$true] %s1339
      %1342 = dma.vmem_to_hbm [thread:$0]  %s1340, 48, %s5, [#allocation3]
    $region25: #{tpu_custom_call.1} parent=1 // pred_fallthru
      _
    // Predicated region
    $region26: #{tpu_custom_call.1} parent=1 // pred_check
      _
    $region27: #{tpu_custom_call.1} parent=1 // pred_check_branch
      %1344 = sbr.rel (0) target = $region29
    $region28: #{tpu_custom_call.1} parent=1 // pred_region
      _
    $region29: #{tpu_custom_call.1} parent=1 // pred_fallthru
      _
    // Predicated region
    $region30: #{tpu_custom_call.1} parent=1 // pred_check
      _
    $region31: #{tpu_custom_call.1} parent=1 // pred_check_branch
      %1346 = sbr.rel (0) target = $region33
    $region32: #{tpu_custom_call.1} parent=1 // pred_region
      _
    $region33: #{tpu_custom_call.1} parent=1 // pred_fallthru
      _
    // Predicated region
    $region34: #{tpu_custom_call.1} parent=1 // pred_check
      _
    $region35: #{tpu_custom_call.1} parent=1 // pred_check_branch
      %1348 = sbr.rel (0) target = $region37
    $region36: #{tpu_custom_call.1} parent=1 // pred_region
      %1349 = dma.done [#allocation3], 48
    $region37: #{tpu_custom_call.1} parent=1 // pred_fallthru
      _
    // Predicated region
    $region38: #{tpu_custom_call.1} parent=1 // pred_check
      _
    $region39: #{tpu_custom_call.1} parent=1 // pred_check_branch
      %1351 = sbr.rel (0) target = $region41
    $region40: #{tpu_custom_call.1} parent=1 // pred_region
      _
    $region41: #{tpu_custom_call.1} parent=1 // pred_fallthru
      _
    %1352 = vsyncpa [#allocation3], 1

</llo_original>
